<compile_context>
chip_gen: v6e
topology: v6e:2x2x1
jax: 0.10.0
libtpu: 0.0.40
codegen_flags: <defaults>
</compile_context>

<pallas_src>
import math

import jax
import jax.numpy as jnp
from jax.experimental import pallas as pl
from jax.experimental.pallas import tpu as pltpu

N_MODELS = 5                         # mirrors n_models_global in the reference
_LANE = 128                          # TPU lane width
_TARGET_BLOCK_BYTES = 4 * 1024 * 1024   # ~4 MiB lane-dense blocks
_VMEM_LIMIT_BYTES = 32 * 1024 * 1024    # 2x2 buffers of 4 MiB = 16 MiB << limit


def _ceil_div(a, b):
    return -(-a // b)


def _sublane_multiple(dtype):
    """Packed-sublane granularity: 8 for 4-byte, 16 for 2-byte, 32 for 1-byte."""
    itemsize = jnp.dtype(dtype).itemsize
    return max(8, 32 // itemsize)


def _replicate_kernel(x_ref, o_ref):
    # x_ref: (tile_rows, 128) input tile (resident across the model axis).
    # o_ref: (tile_rows, 128) view of out[model, row_tile] -> full-width vst.
    o_ref[...] = x_ref[...]


def _replicate_tiled(x2d, n_models, tile_rows):
    rows, lanes = x2d.shape
    itemsize = jnp.dtype(x2d.dtype).itemsize
    grid = (_ceil_div(rows, tile_rows), n_models)
    return pl.pallas_call(
        _replicate_kernel,
        out_shape=jax.ShapeDtypeStruct((n_models, rows, lanes), x2d.dtype),
        grid_spec=pltpu.PrefetchScalarGridSpec(
            num_scalar_prefetch=0,
            grid=grid,
            # Input block depends only on the row tile -> stays resident in
            # VMEM across the (inner, "arbitrary") model axis: one HBM read
            # per row tile.
            in_specs=[pl.BlockSpec((tile_rows, lanes), lambda r, i: (r, 0))],
            out_specs=pl.BlockSpec(
                (pl.Squeezed(), tile_rows, lanes),
                lambda r, i: (i, r, 0),
            ),
        ),
        compiler_params=pltpu.CompilerParams(
            # Row axis "parallel" -> megacore shards balanced row tiles;
            # model axis "arbitrary" -> input residency per row tile per core.
            dimension_semantics=("parallel", "arbitrary"),
            vmem_limit_bytes=_VMEM_LIMIT_BYTES,
        ),
        cost_estimate=pl.CostEstimate(
            flops=0,
            transcendentals=0,
            bytes_accessed=(1 + n_models) * rows * lanes * itemsize,
        ),
    )(x2d)


def _pick_tile_rows(rows, dtype):
    """Bytes-based tile sizing, dtype-aware sublane rounding, >=2 row tiles."""
    itemsize = jnp.dtype(dtype).itemsize
    sub = _sublane_multiple(dtype)
    if rows <= sub:
        # Single block equal to the full row extent (block == array dims).
        return rows
    # ~4 MiB of rows, rounded down to the packed-sublane multiple.
    target_rows = max(sub, (_TARGET_BLOCK_BYTES // (_LANE * itemsize * sub)) * sub)
    # Clamp to ~rows/2 (rounded up to sub) so the row axis splits across 2 TCs.
    half_rows = max(sub, _ceil_div(_ceil_div(rows, 2), sub) * sub)
    return min(target_rows, half_rows)


def input_layer(x, n_models=N_MODELS):
    """Pallas equivalent of InputLayer.forward: stack x n_models times."""
    orig_shape = tuple(x.shape)
    total = math.prod(orig_shape)

    flat = x.reshape(total)
    padded = _ceil_div(total, _LANE) * _LANE
    if padded != total:
        # Pad only up to the lane width (< 128 elements, input-sized cost).
        flat = jnp.pad(flat, (0, padded - total))
    rows = padded // _LANE
    x2d = flat.reshape(rows, _LANE)

    tile_rows = _pick_tile_rows(rows, x.dtype)
    out3d = _replicate_tiled(x2d, n_models, tile_rows)

    out_flat = out3d.reshape(n_models, padded)
    if padded != total:
        # Extra output-sized copy only for lane-unaligned element counts.
        out_flat = out_flat[:, :total]
    return out_flat.reshape((n_models,) + orig_shape)


if __name__ == "__main__":
    key = jax.random.PRNGKey(0)
    k1, k2, k3, k4 = jax.random.split(key, 4)

    # Small NCHW input (lane-aligned -> zero-copy reshape path).
    x = jax.random.normal(k1, (2, 4, 16, 16), dtype=jnp.float32)
    out = jax.block_until_ready(input_layer(x, n_models=N_MODELS))
    ref = jnp.broadcast_to(x[None], (N_MODELS,) + x.shape)
    assert out.shape == (N_MODELS, 2, 4, 16, 16), out.shape
    assert out.dtype == x.dtype
    assert bool(jnp.array_equal(out, ref))

    # Element count not a multiple of 128 -> exercises the pad/de-pad path.
    x_odd = jax.random.normal(k2, (2, 3, 5, 7), dtype=jnp.float32)
    out_odd = jax.block_until_ready(input_layer(x_odd, n_models=3))
    assert bool(jnp.array_equal(
        out_odd, jnp.broadcast_to(x_odd[None], (3,) + x_odd.shape)))

    # bf16 input -> exercises dtype-aware (16-row) sublane granularity.
    x_bf16 = jax.random.normal(k3, (2, 4, 16, 16), dtype=jnp.float32).astype(jnp.bfloat16)
    out_bf16 = jax.block_until_ready(input_layer(x_bf16, n_models=N_MODELS))
    assert out_bf16.dtype == jnp.bfloat16
    assert bool(jnp.array_equal(
        out_bf16, jnp.broadcast_to(x_bf16[None], (N_MODELS,) + x_bf16.shape)))

    # Larger input (1 MiB in, 5 MiB out) -> exercises the multi-row-tile grid.
    x_big = jax.random.normal(k4, (4, 8, 64, 128), dtype=jnp.float32)
    out_big = jax.block_until_ready(input_layer(x_big, n_models=N_MODELS))
    assert bool(jnp.array_equal(
        out_big, jnp.broadcast_to(x_big[None], (N_MODELS,) + x_big.shape)))

    print("KERNEL_OK")
</pallas_src>

<mosaic_0001>
module attributes {stable_mosaic.version = 11 : i64} {
  func.func @_replicate_kernel(%arg0: i32, %arg1: i32, %arg2: memref<8x128xf32, #tpu.memory_space<vmem>>, %arg3: memref<1x8x128xf32, #tpu.memory_space<vmem>>) attributes {dimension_semantics = [#tpu.dimension_semantics<parallel>, #tpu.dimension_semantics<arbitrary>], iteration_bounds = array<i64: 2, 5>, scalar_prefetch = 0 : i64, scratch_operands = 0 : i64, tpu.core_type = #tpu.core_type<tc>, window_params = [{transform_indices = @transform_0, window_bounds = array<i64: 8, 128>}, {transform_indices = @transform_1, window_bounds = array<i64: 1, 8, 128>}]} {
    %c0 = arith.constant 0 : index
    %c0_0 = arith.constant 0 : index
    %0 = vector.load %arg2[%c0, %c0_0] : memref<8x128xf32, #tpu.memory_space<vmem>>, vector<8x128xf32>
    %c0_1 = arith.constant 0 : index
    %c0_2 = arith.constant 0 : index
    %c0_3 = arith.constant 0 : index
    %1 = vector.load %arg3[%c0_1, %c0_2, %c0_3] : memref<1x8x128xf32, #tpu.memory_space<vmem>>, vector<1x8x128xf32>
    %2 = vector.shape_cast %1 : vector<1x8x128xf32> to vector<8x128xf32>
    %3 = vector.shape_cast %0 : vector<8x128xf32> to vector<1x8x128xf32>
    tpu.vector_store %arg3[%c0_1, %c0_2, %c0_3], %3 {strides = array<i32>} : memref<1x8x128xf32, #tpu.memory_space<vmem>>, vector<1x8x128xf32>,
    return
  }
  func.func @transform_0(%arg0: i32, %arg1: i32) -> (i32, i32) {
    %c0_i32 = arith.constant 0 : i32
    %c0_i32_0 = arith.constant 0 : i32
    return %arg0, %c0_i32 : i32, i32
  }
  func.func @transform_1(%arg0: i32, %arg1: i32) -> (i32, i32, i32) {
    %c0_i32 = arith.constant 0 : i32
    %c0_i32_0 = arith.constant 0 : i32
    return %arg1, %arg0, %c0_i32 : i32, i32, i32
  }
}

</mosaic_0001>

<llo_original>
// kernel: tpu_custom_call.1
$region0: #{tpu_custom_call.1}
  #allocation0 [shape = 'u32[]', space=smem, size = 0x4, offset = 0x4, fixed_abs, tag = 'smem constant byte address 0x4 - core index']
  #allocation1 [shape = 'u32[144,128]{1,0:T(1,128)}', space=vmem, size = 0x12000, scoped, tag = 'internal scratch']
  %s0 = inlined_call_operand.hbm [shape: f32[16,128], index: 0, kind: input, shape index: {}]
  %s1 = inlined_call_operand.hbm [shape: f32[5,16,128], index: 1, kind: output, shape index: {}]
  %s2 = sld [smem:[#allocation0]]
  $region41: #{tpu_custom_call.1} parent=0
    _
  %s4 = ssub.s32 1, %s2
  %s5 = scalar_select 0, %s4, %s2
  $region1: #{tpu_custom_call.1} parent=0
    #allocation2 [shape = 'u8[8192]{0}', space=vmem, size = 0x2000, scoped, tag = 'input window, operand 0']
    #allocation3 [shape = 's32[2]{0}', space=sflag, size = 0x8, scoped, tag = 'scoped memory for tpu_custom_call.1']
    #allocation4 [shape = 's32[2]{0}', space=sflag, size = 0x8, scoped, tag = 'scoped memory for tpu_custom_call.1']
    #allocation5 [shape = 'u8[8192]{0}', space=vmem, size = 0x2000, scoped, tag = 'output window, operand 0']
    %6 = vsyncpa [#allocation3], 0
    %s7 = scalar_lea.sflag [#allocation3], 1
    %8 = vsyncpa %s7, 0
    %9 = vsyncpa [#allocation4], 0
    %s10 = scalar_lea.sflag [#allocation4], 1
    %11 = vsyncpa %s10, 0
    loop: start=0, step=1, limit=12
    $region2: #{tpu_custom_call.1} parent=1 // loop_pre_header
      _
    $region3: #{tpu_custom_call.1} parent=1 // loop_header
      %s13 = sphi 0, %s17
      %p14 = scmp.ge.s32.totalorder %s13, 12
      %s20 = sphi 0, %s32
      %s21 = sphi 0, %s28
      %s22 = sphi 0, %s20
      %s23 = sphi 0, %s21
      %s24 = sphi 0, %s22
      %s25 = sphi 0, %s23
      %s35 = sphi 0, %s37
      %s38 = sphi 0, %s35
      %s39 = sphi 0, %s38
      %s55 = sphi 0, %s39
      %s63 = sphi 0, %s65
      %s66 = sphi 0, %s63
      %s67 = sphi 0, %s66
      %s83 = sphi 0, %s67
    $region4: #{tpu_custom_call.1} parent=1 // loop_header_branch
      %16 = sbr.rel (%p14) target = $region8
    $region5: #{tpu_custom_call.1} parent=1 // loop_body
      %s18 = ssub.s32 %s13, 1
      %s19 = ssub.s32 %s13, 2
      %s26 = sadd.s32 1, %s21
      %p27 = scmp.ge.s32.totalorder %s26, 5
      %s28 = scalar_select %p27, 0, %s26
      %s29 = sadd.s32 1, %s20
      %s30 = scalar_select %p27, %s29, %s20
      %p31 = scmp.ge.s32.totalorder %s30, 2
      %s32 = scalar_select %p31, 0, %s30
      %s33 = ssub.s32 %s20, %s32
      %p34 = scmp.eq.s32.totalorder %s33, 0
      %s36 = sadd.s32 %s35, 1
      %s37 = scalar_select %p34, %s35, %s36
      %p40 = pneg %p34
      %p41 = scmp.eq.s32.totalorder %s13, 9
      %p42 = por %p40, %p41
      %p43 = scmp.ne.s32.totalorder %s35, %s38
      %p44 = scmp.eq.s32.totalorder %s13, 0
      %p45 = por %p43, %p44
      %p46 = scmp.ne.s32.totalorder %s35, %s38
      %p47 = scmp.eq.s32.totalorder %s18, 9
      %p48 = por %p46, %p47
      %p49 = scmp.ne.s32.totalorder %s38, %s39
      %p50 = scmp.eq.s32.totalorder %s18, 0
      %p51 = por %p49, %p50
      %p52 = scmp.ne.s32.totalorder %s38, %s39
      %p53 = scmp.eq.s32.totalorder %s19, 9
      %p54 = por %p52, %p53
      %p56 = scmp.ne.s32.totalorder %s39, %s55
      %p57 = scmp.eq.s32.totalorder %s19, 0
      %p58 = por %p56, %p57
      %s59 = ssub.s32 %s21, %s28
      %s60 = ssub.s32 %s20, %s32
      %s61 = sor.u32 %s59, %s60
      %p62 = scmp.eq.s32.totalorder %s61, 0
      %s64 = sadd.s32 %s63, 1
      %s65 = scalar_select %p62, %s63, %s64
      %p68 = pneg %p62
      %p69 = scmp.eq.s32.totalorder %s13, 9
      %p70 = por %p68, %p69
      %p71 = scmp.ne.s32.totalorder %s63, %s66
      %p72 = scmp.eq.s32.totalorder %s13, 0
      %p73 = por %p71, %p72
      %p74 = scmp.ne.s32.totalorder %s63, %s66
      %p75 = scmp.eq.s32.totalorder %s18, 9
      %p76 = por %p74, %p75
      %p77 = scmp.ne.s32.totalorder %s66, %s67
      %p78 = scmp.eq.s32.totalorder %s18, 0
      %p79 = por %p77, %p78
      %p80 = scmp.ne.s32.totalorder %s66, %s67
      %p81 = scmp.eq.s32.totalorder %s19, 9
      %p82 = por %p80, %p81
      %p84 = scmp.ne.s32.totalorder %s67, %s83
      %p85 = scmp.eq.s32.totalorder %s19, 0
      %p86 = por %p84, %p85
      %p87 = scmp.le.s32.totalorder 1, %s13
      %p88 = scmp.lt.s32.totalorder %s13, 11
      %p89 = pnand %p87, %p88
      %p90 = pneg %p89
      // Predicated region
      $region9: #{tpu_custom_call.1} parent=5 // pred_check
        _
      $region10: #{tpu_custom_call.1} parent=5 // pred_check_branch
        %92 = sbr.rel (%p89) target = $region12
      $region11: #{tpu_custom_call.1} parent=5 // pred_region
        %s93 = ssub.s32 %s13, 1
      $region12: #{tpu_custom_call.1} parent=5 // pred_fallthru
        _
      %p94 = scmp.lt.s32.totalorder %s13, 10
      // Predicated region
      $region13: #{tpu_custom_call.1} parent=5 // pred_check
        %p95 = pneg %p94
      $region14: #{tpu_custom_call.1} parent=5 // pred_check_branch
        %97 = sbr.rel (%p95) target = $region16
      $region15: #{tpu_custom_call.1} parent=5 // pred_region
        // Predicated region
        $region17: #{tpu_custom_call.1} parent=15 // pred_check
          %p98 = pneg %p45
        $region18: #{tpu_custom_call.1} parent=15 // pred_check_branch
          %100 = sbr.rel (%p98) target = $region20
        $region19: #{tpu_custom_call.1} parent=15 // pred_region
          %s101 = sand.u32 %s35, 1
          %s102 = scalar_lea.sflag [#allocation3], %s101
          %s103 = sand.u32 %s35, 1
          %s104 = smul.addr %s103, 8
          %s105 = scalar_lea.vmem [#allocation2], %s104
          %s107 = ssub.s32 128, 128
          %108 = vsyncadd %s102, %s107
          %s109 = smul.addr %s20, 128
          %s110 = scalar_lea.hbm %s0, %s109
          %s112 = sshll.u32 %s105, 4
          %s113 = int_to_ptr.vmem [resolvable:$true] %s112
          %115 = dma.hbm_to_vmem [thread:$0]  %s110, 128, %s113, %s102
        $region20: #{tpu_custom_call.1} parent=15 // pred_fallthru
          _
      $region16: #{tpu_custom_call.1} parent=5 // pred_fallthru
        _
      %p116 = scmp.le.s32.totalorder 1, %s13
      %p117 = scmp.lt.s32.totalorder %s13, 11
      %p118 = pnand %p116, %p117
      %p119 = pneg %p118
      // Predicated region
      $region21: #{tpu_custom_call.1} parent=5 // pred_check
        _
      $region22: #{tpu_custom_call.1} parent=5 // pred_check_branch
        %121 = sbr.rel (%p118) target = $region24
      $region23: #{tpu_custom_call.1} parent=5 // pred_region
        %s122 = ssub.s32 %s13, 1
        %s123 = sand.u32 %s38, 1
        %s124 = scalar_lea.sflag [#allocation3], %s123
        %s125 = sand.u32 %s38, 1
        %s126 = smul.addr %s125, 8
        %s127 = scalar_lea.vmem [#allocation2], %s126
        // Predicated region
        $region25: #{tpu_custom_call.1} parent=23 // pred_check
          %p128 = pneg %p51
        $region26: #{tpu_custom_call.1} parent=23 // pred_check_branch
          %130 = sbr.rel (%p128) target = $region28
        $region27: #{tpu_custom_call.1} parent=23 // pred_region
          %131 = dma.done %s124, 128
        $region28: #{tpu_custom_call.1} parent=23 // pred_fallthru
          _
        %s132 = sand.u32 %s38, 1
        %s133 = scalar_lea.sflag [#allocation3], %s132
        %s134 = sand.u32 %s38, 1
        %s135 = smul.addr %s134, 8
        %s136 = scalar_lea.vmem [#allocation2], %s135
        %p137 = pneg %p51
        %p138 = pneg %p48
        %p139 = pneg %p79
        %p140 = pneg %p76
        %s141 = sand.u32 %s66, 1
        %s142 = scalar_lea.sflag [#allocation4], %s141
        %s143 = sand.u32 %s66, 1
        %s144 = smul.addr %s143, 8
        %s145 = scalar_lea.vmem [#allocation5], %s144
        %v146 = vld [vmem:[%s127] sm:$0xff]
        %147 = vst [vmem:[%s145] sm:$0xff] %v146
        %s148 = sand.u32 %s66, 1
        %s149 = scalar_lea.sflag [#allocation4], %s148
        %s150 = sand.u32 %s66, 1
        %s151 = smul.addr %s150, 8
        %s152 = scalar_lea.vmem [#allocation5], %s151
        // Predicated region
        $region29: #{tpu_custom_call.1} parent=23 // pred_check
          %p153 = pneg %p76
        $region30: #{tpu_custom_call.1} parent=23 // pred_check_branch
          %155 = sbr.rel (%p153) target = $region32
        $region31: #{tpu_custom_call.1} parent=23 // pred_region
          %s157 = ssub.s32 128, 128
          %158 = vsyncadd %s149, %s157
          %s159 = smul.addr %s23, 2
          %s160 = sadd.s32 %s22, %s159
          %s161 = smul.addr %s160, 128
          %s162 = scalar_lea.hbm %s1, %s161
          %s164 = sshll.u32 %s152, 4
          %s165 = int_to_ptr.vmem [resolvable:$true] %s164
          %167 = dma.vmem_to_hbm [thread:$0]  %s165, 128, %s162, %s149
        $region32: #{tpu_custom_call.1} parent=23 // pred_fallthru
          _
      $region24: #{tpu_custom_call.1} parent=5 // pred_fallthru
        _
      %p168 = scmp.le.s32.totalorder 2, %s13
      // Predicated region
      $region33: #{tpu_custom_call.1} parent=5 // pred_check
        %p169 = pneg %p168
      $region34: #{tpu_custom_call.1} parent=5 // pred_check_branch
        %171 = sbr.rel (%p169) target = $region36
      $region35: #{tpu_custom_call.1} parent=5 // pred_region
        %s172 = ssub.s32 %s13, 2
        // Predicated region
        $region37: #{tpu_custom_call.1} parent=35 // pred_check
          %p173 = pneg %p82
        $region38: #{tpu_custom_call.1} parent=35 // pred_check_branch
          %175 = sbr.rel (%p173) target = $region40
        $region39: #{tpu_custom_call.1} parent=35 // pred_region
          %s176 = sand.u32 %s67, 1
          %s177 = scalar_lea.sflag [#allocation4], %s176
          %s178 = sand.u32 %s67, 1
          %s179 = smul.addr %s178, 8
          %s180 = scalar_lea.vmem [#allocation5], %s179
          %181 = dma.done %s177, 128
        $region40: #{tpu_custom_call.1} parent=35 // pred_fallthru
          _
      $region36: #{tpu_custom_call.1} parent=5 // pred_fallthru
        _
    $region6: #{tpu_custom_call.1} parent=1 // loop_footer
      %s17 = sadd.s32 1, %s13
    $region7: #{tpu_custom_call.1} parent=1 // loop_footer_branch
      %12 = sbr.rel target = $region3
    $region8: #{tpu_custom_call.1} parent=1 // loop_exit
      _
    %182 = vsyncpa [#allocation3], 1
    %s183 = scalar_lea.sflag [#allocation3], 1
    %184 = vsyncpa %s183, 1
    %185 = vsyncpa [#allocation4], 1
    %s186 = scalar_lea.sflag [#allocation4], 1
    %187 = vsyncpa %s186, 1

</llo_original>
